<compile_context>
chip_gen: v6e
topology: v6e:2x2x1
jax: 0.10.0
libtpu: 0.0.40
codegen_flags: <defaults>
</compile_context>

<pallas_src>
import functools

import numpy as np
import jax
import jax.numpy as jnp
from jax.experimental import pallas as pl
from jax.experimental.pallas import tpu as pltpu


# ---------------------------------------------------------------------------
# kernel
# ---------------------------------------------------------------------------
def _apply_kernel(w_ref, x_ref, shift_ref, o_ref, *, activation):
    """z = (w_scaled @ x_tile) + shift -> activation, stored lane-dense.

    w_ref     : (C, Cin)     BN-scale-folded transposed-conv weight, rows ordered (c_out, kh, kw)
    x_ref     : (1, Cin, T)  one batch element, one HW column tile (Cin on the sublane/K side)
    shift_ref : (C, 1)       folded BN shift (beta - mean*scale), channel value repeated s*s times
    o_ref     : (1, C, T)    pre-shuffle output tile (lane-dense, unmasked stores for T % 128 == 0)
    """
    z = jnp.dot(w_ref[...], x_ref[0], preferred_element_type=jnp.float32)   # (C, T) on the MXU
    z = z + shift_ref[...]                                                   # broadcast over lanes
    if activation == "relu":
        z = jnp.maximum(z, 0.0)
    else:  # sigmoid
        z = jax.nn.sigmoid(z)
    o_ref[0] = z.astype(o_ref.dtype)


# ---------------------------------------------------------------------------
# wrapper
# ---------------------------------------------------------------------------
def _pick_col_tile(hw, c, cin, itemsize=4, vmem_budget=16 << 20):
    """Largest multiple-of-128 tile dividing hw whose double-buffered x+out tiles fit the budget.

    Budget <=16 MiB keeps the working set inside v5e's 16 MiB default scoped-VMEM limit
    (vmem_limit_bytes=28 MiB gives headroom) and well under v7x's 64 MiB per-TensorCore VMEM.
    """
    if hw % 128 != 0:
        return hw  # tiny / odd spatial sizes: take the whole pixel row as one block
    cin_pad = ((max(cin, 8) + 7) // 8) * 8
    c_pad = ((c + 7) // 8) * 8
    per_col = 2 * (c_pad + cin_pad) * itemsize          # 2x for double-buffering
    max_t = max(128, (vmem_budget // per_col // 128) * 128)
    t = min(hw, max_t)
    while hw % t:
        t -= 128
    return t


def decoder_forward(x, weight, bias, gamma, beta, *, stride, activation="relu",
                    eps=1e-5, compute_dtype=jnp.float32, col_tile=None):
    """x: (N, Cin, H, W) float32 NCHW (PyTorch layout). Returns (N, Cout, H*s, W*s) float32.

    compute_dtype=jnp.bfloat16 halves the x/weight DMA streams on v6e/v7x (accumulation stays
    f32 via preferred_element_type); default f32 preserves strict parity with the reference.
    """
    N, Cin, H, W = x.shape
    w_cin, Cout, kh, kw = weight.shape
    assert w_cin == Cin and kh == stride and kw == stride
    assert activation in ("relu", "sigmoid")
    s = stride
    ss = s * s
    C = Cout * ss
    HW = H * W

    if col_tile is None:
        col_tile = _pick_col_tile(HW, C, Cin)
    assert HW % col_tile == 0
    n_tiles = HW // col_tile
    grid = (N, n_tiles)

    x3 = x.reshape(N, Cin, HW)                                             # free view of NCHW
    xf = x3.astype(jnp.float32)
    w_t = jnp.transpose(weight.reshape(Cin, C)).astype(jnp.float32)        # (C, Cin), rows (c_out, kh, kw)

    # ---- BN batch statistics from x only (O(Cin^2 * N*HW) XLA work on the small tensor) ------
    # NOTE: the ConvTranspose bias is NOT added anywhere: training-mode BN subtracts the batch
    # mean, so a per-channel constant added before BN cancels exactly (bias accepted but unused).
    sx = jnp.sum(xf, axis=(0, 2))                                          # (Cin,)
    gram = jnp.einsum("nip,njp->ij", xf, xf)                               # (Cin, Cin) Gram matrix
    row_sum = w_t @ sx                                                     # (C,)
    row_sq = jnp.sum((w_t @ gram) * w_t, axis=1)                           # (C,) = diag(w_t G w_t^T)
    ch_sum = row_sum.reshape(Cout, ss).sum(axis=1)                         # (Cout,)
    ch_sq = row_sq.reshape(Cout, ss).sum(axis=1)                           # (Cout,)
    count = float(N * HW * ss)                                             # N * H_out * W_out
    mean = ch_sum / count
    var = ch_sq / count - mean * mean                                      # biased variance (train mode)
    # TODO(synk): single-pass E[y^2]-E[y]^2 can lose precision when |mean| >> std; add a
    # centered second pass if tolerances tighten at scale.
    scale_ch = gamma.astype(jnp.float32) * jax.lax.rsqrt(var + eps)
    shift_ch = beta.astype(jnp.float32) - mean * scale_ch

    # Fold the BN scale into the weight; kernel applies only "+ shift" + activation.
    w_scaled = (w_t * jnp.repeat(scale_ch, ss)[:, None]).astype(compute_dtype)   # (C, Cin)
    shift_col = jnp.repeat(shift_ch, ss)[:, None]                                # (C, 1) f32
    xk = x3.astype(compute_dtype)

    cparams = pltpu.CompilerParams(
        dimension_semantics=("parallel", "parallel"),   # megacore may split either axis (v7x)
        vmem_limit_bytes=28 << 20,                      # > v5e's 16 MiB default, < v7x's 64 MiB physical
    )

    y = pl.pallas_call(
        functools.partial(_apply_kernel, activation=activation),
        out_shape=jax.ShapeDtypeStruct((N, C, HW), jnp.float32),
        grid=grid,
        in_specs=[pl.BlockSpec((C, Cin), lambda n, t: (0, 0)),
                  pl.BlockSpec((1, Cin, col_tile), lambda n, t: (n, 0, t)),
                  pl.BlockSpec((C, 1), lambda n, t: (0, 0))],
        out_specs=pl.BlockSpec((1, C, col_tile), lambda n, t: (n, 0, t)),
        compiler_params=cparams,
    )(w_scaled, xk, shift_col)

    # glue: (N, C, HW) with rows (c_out, kh, kw), cols (h, w)  ->  NCHW upsampled output.
    # TODO(synk): fusing this depth-to-space into the kernel store needs an in-kernel
    # (kh,kw)<->(h,w) interleave (rank-5 transpose / lane-strided stores) that Mosaic does not
    # reliably lower; kept as a single XLA copy for robustness on v5e/v6e/v7x.
    y = y.reshape(N, Cout, s, s, H, W)
    y = jnp.transpose(y, (0, 1, 4, 2, 5, 3)).reshape(N, Cout, H * s, W * s)
    return y


# ---------------------------------------------------------------------------
# pure-JAX reference (mirrors PyTorch: ConvT(k=s,stride=s) + bias -> BN(train) -> act)
# ---------------------------------------------------------------------------
def decoder_reference(x, weight, bias, gamma, beta, *, stride, activation="relu", eps=1e-5):
    N, Cin, H, W = x.shape
    _, Cout, s, _ = weight.shape
    y = jnp.einsum("nihw,iokl->nohkwl", x, weight)                         # (N, Cout, H, s, W, s)
    y = y.reshape(N, Cout, H * s, W * s) + bias[None, :, None, None]
    mean = jnp.mean(y, axis=(0, 2, 3), keepdims=True)
    var = jnp.mean((y - mean) ** 2, axis=(0, 2, 3), keepdims=True)         # biased variance
    z = (y - mean) * jax.lax.rsqrt(var + eps)
    z = z * gamma[None, :, None, None] + beta[None, :, None, None]
    if activation == "relu":
        return jnp.maximum(z, 0.0)
    return jax.nn.sigmoid(z)


if __name__ == "__main__":
    # input_channels=4, output_channels=8, stride=2, 16x16 spatial -> 32x32 output
    N, Cin, H, W = 2, 4, 16, 16
    Cout, stride = 8, 2

    key = jax.random.PRNGKey(0)
    kx, kw_, kb, kg, kbeta = jax.random.split(key, 5)

    x = jax.random.normal(kx, (N, Cin, H, W), dtype=jnp.float32)
    weight = jax.random.normal(kw_, (Cin, Cout, stride, stride), dtype=jnp.float32) * 0.2
    bias = jax.random.normal(kb, (Cout,), dtype=jnp.float32) * 0.1
    gamma = 1.0 + 0.1 * jax.random.normal(kg, (Cout,), dtype=jnp.float32)
    beta = 0.1 * jax.random.normal(kbeta, (Cout,), dtype=jnp.float32)

    for act in ("relu", "sigmoid"):
        out = decoder_forward(x, weight, bias, gamma, beta, stride=stride, activation=act)
        out = jax.block_until_ready(out)
        ref = decoder_reference(x, weight, bias, gamma, beta, stride=stride, activation=act)
        np.testing.assert_allclose(np.asarray(out), np.asarray(ref), rtol=3e-4, atol=3e-4)
        assert out.shape == (N, Cout, H * stride, W * stride)

    print("KERNEL_OK")
</pallas_src>

<mosaic_0001>
module attributes {stable_mosaic.version = 11 : i64} {
  func.func @_apply_kernel(%arg0: i32, %arg1: i32, %arg2: memref<32x4xf32, #tpu.memory_space<vmem>>, %arg3: memref<1x4x256xf32, #tpu.memory_space<vmem>>, %arg4: memref<32x1xf32, #tpu.memory_space<vmem>>, %arg5: memref<1x32x256xf32, #tpu.memory_space<vmem>>) attributes {dimension_semantics = [#tpu.dimension_semantics<parallel>, #tpu.dimension_semantics<parallel>], iteration_bounds = array<i64: 2, 1>, scalar_prefetch = 0 : i64, scratch_operands = 0 : i64, tpu.core_type = #tpu.core_type<tc>, window_params = [{pipeline_mode = #tpu.pipeline_mode<synchronous>, transform_indices = @transform_0, window_bounds = array<i64: 32, 4>}, {transform_indices = @transform_1, window_bounds = array<i64: 1, 4, 256>}, {pipeline_mode = #tpu.pipeline_mode<synchronous>, transform_indices = @transform_2, window_bounds = array<i64: 32, 1>}, {transform_indices = @transform_3, window_bounds = array<i64: 1, 32, 256>}]} {
    %c0 = arith.constant 0 : index
    %c0_0 = arith.constant 0 : index
    %0 = vector.load %arg2[%c0, %c0_0] : memref<32x4xf32, #tpu.memory_space<vmem>>, vector<32x4xf32>
    %c0_1 = arith.constant 0 : index
    %c0_2 = arith.constant 0 : index
    %c0_3 = arith.constant 0 : index
    %1 = vector.load %arg3[%c0_1, %c0_2, %c0_3] : memref<1x4x256xf32, #tpu.memory_space<vmem>>, vector<1x4x256xf32>
    %2 = vector.shape_cast %1 : vector<1x4x256xf32> to vector<4x256xf32>
    %cst = arith.constant dense<0.000000e+00> : vector<32x256xf32>
    %3 = tpu.matmul %0, %2, %cst {dimension_numbers = #tpu.dot_dimension_numbers<[1], [0], [0], [1], [0, 0, 1, 1], [], []>} : vector<32x4xf32>, vector<4x256xf32>, vector<32x256xf32> -> vector<32x256xf32>
    %c0_4 = arith.constant 0 : index
    %c0_5 = arith.constant 0 : index
    %4 = vector.load %arg4[%c0_4, %c0_5] : memref<32x1xf32, #tpu.memory_space<vmem>>, vector<32x1xf32>
    %5 = vector.broadcast %4 : vector<32x1xf32> to vector<32x256xf32>
    %6 = arith.addf %3, %5 : vector<32x256xf32>
    %cst_6 = arith.constant 0.000000e+00 : f32
    %7 = vector.broadcast %cst_6 : f32 to vector<32x256xf32>
    %8 = arith.maximumf %6, %7 : vector<32x256xf32>
    %c0_7 = arith.constant 0 : index
    %c0_8 = arith.constant 0 : index
    %c0_9 = arith.constant 0 : index
    %9 = vector.load %arg5[%c0_7, %c0_8, %c0_9] : memref<1x32x256xf32, #tpu.memory_space<vmem>>, vector<1x32x256xf32>
    %10 = vector.shape_cast %9 : vector<1x32x256xf32> to vector<32x256xf32>
    %11 = vector.shape_cast %8 : vector<32x256xf32> to vector<1x32x256xf32>
    tpu.vector_store %arg5[%c0_7, %c0_8, %c0_9], %11 {strides = array<i32>} : memref<1x32x256xf32, #tpu.memory_space<vmem>>, vector<1x32x256xf32>,
    return
  }
  func.func @transform_0(%arg0: i32, %arg1: i32) -> (i32, i32) {
    %c0_i32 = arith.constant 0 : i32
    %c0_i32_0 = arith.constant 0 : i32
    %c0_i32_1 = arith.constant 0 : i32
    return %c0_i32, %c0_i32_0 : i32, i32
  }
  func.func @transform_1(%arg0: i32, %arg1: i32) -> (i32, i32, i32) {
    %c0_i32 = arith.constant 0 : i32
    %c0_i32_0 = arith.constant 0 : i32
    return %arg0, %c0_i32, %arg1 : i32, i32, i32
  }
  func.func @transform_2(%arg0: i32, %arg1: i32) -> (i32, i32) {
    %c0_i32 = arith.constant 0 : i32
    %c0_i32_0 = arith.constant 0 : i32
    %c0_i32_1 = arith.constant 0 : i32
    return %c0_i32, %c0_i32_0 : i32, i32
  }
  func.func @transform_3(%arg0: i32, %arg1: i32) -> (i32, i32, i32) {
    %c0_i32 = arith.constant 0 : i32
    %c0_i32_0 = arith.constant 0 : i32
    return %arg0, %c0_i32, %arg1 : i32, i32, i32
  }
}

</mosaic_0001>

<llo_original>
// kernel: tpu_custom_call.1
$region0: #{tpu_custom_call.1}
  #allocation0 [shape = 'u32[]', space=smem, size = 0x4, offset = 0x4, fixed_abs, tag = 'smem constant byte address 0x4 - core index']
  #allocation1 [shape = 'u32[144,128]{1,0:T(1,128)}', space=vmem, size = 0x12000, scoped, tag = 'internal scratch']
  %s0 = inlined_call_operand.vmem [shape: f32[32,4], index: 0, kind: input, shape index: {}]
  %s1 = inlined_call_operand.vmem [shape: f32[2,4,256], index: 1, kind: input, shape index: {}]
  %s2 = inlined_call_operand.vmem [shape: f32[32,1], index: 2, kind: input, shape index: {}]
  %s3 = inlined_call_operand.hbm [shape: f32[2,32,256], index: 3, kind: output, shape index: {}]
  %s4 = sld [smem:[#allocation0]]
  $region45: #{tpu_custom_call.1} parent=0
    _
  %s6 = ssub.s32 1, %s4
  %s7 = scalar_select 0, %s6, %s4
  $region1: #{tpu_custom_call.1} parent=0
    #allocation2 [shape = 'u8[65536]{0}', space=vmem, size = 0x10000, scoped, tag = 'output window, operand 0']
    #allocation3 [shape = 's32[2]{0}', space=sflag, size = 0x8, scoped, tag = 'scoped memory for tpu_custom_call.1']
    %8 = vsyncpa [#allocation3], 0
    %s9 = scalar_lea.sflag [#allocation3], 1
    %10 = vsyncpa %s9, 0
    loop: start=0, step=1, limit=4
    $region2: #{tpu_custom_call.1} parent=1 // loop_pre_header
      _
    $region3: #{tpu_custom_call.1} parent=1 // loop_header
      %s12 = sphi 0, %s16
      %p13 = scmp.ge.s32.totalorder %s12, 4
      %s19 = sphi 0, %s31
      %s20 = sphi 0, %s27
      %s21 = sphi 0, %s19
      %s22 = sphi 0, %s20
      %s23 = sphi 0, %s21
      %s24 = sphi 0, %s22
      %s32 = sphi 0, %s32
      %s34 = sphi 0, %s32
      %s35 = sphi 0, %s34
      %s49 = sphi 0, %s35
      %s57 = sphi 0, %s59
      %s60 = sphi 0, %s57
      %s61 = sphi 0, %s60
      %s77 = sphi 0, %s61
      %s81 = sphi 0, %s81
      %s83 = sphi 0, %s81
      %s84 = sphi 0, %s83
      %s98 = sphi 0, %s84
      %s106 = sphi 0, %s108
      %s109 = sphi 0, %s106
      %s110 = sphi 0, %s109
      %s126 = sphi 0, %s110
    $region4: #{tpu_custom_call.1} parent=1 // loop_header_branch
      %15 = sbr.rel (%p13) target = $region8
    $region5: #{tpu_custom_call.1} parent=1 // loop_body
      %s17 = ssub.s32 %s12, 1
      %s18 = ssub.s32 %s12, 2
      %s25 = sadd.s32 1, %s20
      %p26 = scmp.ge.s32.totalorder %s25, 1
      %s27 = scalar_select %p26, 0, %s25
      %s28 = sadd.s32 1, %s19
      %s29 = scalar_select %p26, %s28, %s19
      %p30 = scmp.ge.s32.totalorder %s29, 2
      %s31 = scalar_select %p30, 0, %s29
      %s33 = sadd.s32 %s32, 1
      %p36 = scmp.eq.s32.totalorder %s12, 1
      %p37 = scmp.ne.s32.totalorder %s32, %s34
      %p38 = scmp.eq.s32.totalorder %s12, 0
      %p39 = por %p37, %p38
      %p40 = scmp.ne.s32.totalorder %s32, %s34
      %p41 = scmp.eq.s32.totalorder %s17, 1
      %p42 = por %p40, %p41
      %p43 = scmp.ne.s32.totalorder %s34, %s35
      %p44 = scmp.eq.s32.totalorder %s17, 0
      %p45 = por %p43, %p44
      %p46 = scmp.ne.s32.totalorder %s34, %s35
      %p47 = scmp.eq.s32.totalorder %s18, 1
      %p48 = por %p46, %p47
      %p50 = scmp.ne.s32.totalorder %s35, %s49
      %p51 = scmp.eq.s32.totalorder %s18, 0
      %p52 = por %p50, %p51
      %s53 = ssub.s32 %s19, %s31
      %s54 = ssub.s32 %s20, %s27
      %s55 = sor.u32 %s53, %s54
      %p56 = scmp.eq.s32.totalorder %s55, 0
      %s58 = sadd.s32 %s57, 1
      %s59 = scalar_select %p56, %s57, %s58
      %p62 = pneg %p56
      %p63 = scmp.eq.s32.totalorder %s12, 1
      %p64 = por %p62, %p63
      %p65 = scmp.ne.s32.totalorder %s57, %s60
      %p66 = scmp.eq.s32.totalorder %s12, 0
      %p67 = por %p65, %p66
      %p68 = scmp.ne.s32.totalorder %s57, %s60
      %p69 = scmp.eq.s32.totalorder %s17, 1
      %p70 = por %p68, %p69
      %p71 = scmp.ne.s32.totalorder %s60, %s61
      %p72 = scmp.eq.s32.totalorder %s17, 0
      %p73 = por %p71, %p72
      %p74 = scmp.ne.s32.totalorder %s60, %s61
      %p75 = scmp.eq.s32.totalorder %s18, 1
      %p76 = por %p74, %p75
      %p78 = scmp.ne.s32.totalorder %s61, %s77
      %p79 = scmp.eq.s32.totalorder %s18, 0
      %p80 = por %p78, %p79
      %s82 = sadd.s32 %s81, 1
      %p85 = scmp.eq.s32.totalorder %s12, 1
      %p86 = scmp.ne.s32.totalorder %s81, %s83
      %p87 = scmp.eq.s32.totalorder %s12, 0
      %p88 = por %p86, %p87
      %p89 = scmp.ne.s32.totalorder %s81, %s83
      %p90 = scmp.eq.s32.totalorder %s17, 1
      %p91 = por %p89, %p90
      %p92 = scmp.ne.s32.totalorder %s83, %s84
      %p93 = scmp.eq.s32.totalorder %s17, 0
      %p94 = por %p92, %p93
      %p95 = scmp.ne.s32.totalorder %s83, %s84
      %p96 = scmp.eq.s32.totalorder %s18, 1
      %p97 = por %p95, %p96
      %p99 = scmp.ne.s32.totalorder %s84, %s98
      %p100 = scmp.eq.s32.totalorder %s18, 0
      %p101 = por %p99, %p100
      %s102 = ssub.s32 %s19, %s31
      %s103 = ssub.s32 %s20, %s27
      %s104 = sor.u32 %s102, %s103
      %p105 = scmp.eq.s32.totalorder %s104, 0
      %s107 = sadd.s32 %s106, 1
      %s108 = scalar_select %p105, %s106, %s107
      %p111 = pneg %p105
      %p112 = scmp.eq.s32.totalorder %s12, 1
      %p113 = por %p111, %p112
      %p114 = scmp.ne.s32.totalorder %s106, %s109
      %p115 = scmp.eq.s32.totalorder %s12, 0
      %p116 = por %p114, %p115
      %p117 = scmp.ne.s32.totalorder %s106, %s109
      %p118 = scmp.eq.s32.totalorder %s17, 1
      %p119 = por %p117, %p118
      %p120 = scmp.ne.s32.totalorder %s109, %s110
      %p121 = scmp.eq.s32.totalorder %s17, 0
      %p122 = por %p120, %p121
      %p123 = scmp.ne.s32.totalorder %s109, %s110
      %p124 = scmp.eq.s32.totalorder %s18, 1
      %p125 = por %p123, %p124
      %p127 = scmp.ne.s32.totalorder %s110, %s126
      %p128 = scmp.eq.s32.totalorder %s18, 0
      %p129 = por %p127, %p128
      %p130 = scmp.le.s32.totalorder 1, %s12
      %p131 = scmp.lt.s32.totalorder %s12, 3
      %p132 = pnand %p130, %p131
      %p133 = pneg %p132
      // Predicated region
      $region9: #{tpu_custom_call.1} parent=5 // pred_check
        _
      $region10: #{tpu_custom_call.1} parent=5 // pred_check_branch
        %135 = sbr.rel (%p132) target = $region12
      $region11: #{tpu_custom_call.1} parent=5 // pred_region
        %s136 = ssub.s32 %s12, 1
        // Predicated region
        $region13: #{tpu_custom_call.1} parent=11 // pred_check
          %p137 = pneg %p45
        $region14: #{tpu_custom_call.1} parent=11 // pred_check_branch
          %139 = sbr.rel (%p137) target = $region16
        $region15: #{tpu_custom_call.1} parent=11 // pred_region
          _
        $region16: #{tpu_custom_call.1} parent=11 // pred_fallthru
          _
        // Predicated region
        $region17: #{tpu_custom_call.1} parent=11 // pred_check
          %p140 = pneg %p94
        $region18: #{tpu_custom_call.1} parent=11 // pred_check_branch
          %142 = sbr.rel (%p140) target = $region20
        $region19: #{tpu_custom_call.1} parent=11 // pred_region
          _
        $region20: #{tpu_custom_call.1} parent=11 // pred_fallthru
          _
      $region12: #{tpu_custom_call.1} parent=5 // pred_fallthru
        _
      %p143 = scmp.lt.s32.totalorder %s12, 2
      // Predicated region
      $region21: #{tpu_custom_call.1} parent=5 // pred_check
        %p144 = pneg %p143
      $region22: #{tpu_custom_call.1} parent=5 // pred_check_branch
        %146 = sbr.rel (%p144) target = $region24
      $region23: #{tpu_custom_call.1} parent=5 // pred_region
        // Predicated region
        $region25: #{tpu_custom_call.1} parent=23 // pred_check
          %p147 = pneg %p67
        $region26: #{tpu_custom_call.1} parent=23 // pred_check_branch
          %149 = sbr.rel (%p147) target = $region28
        $region27: #{tpu_custom_call.1} parent=23 // pred_region
          %s150 = smul.u32 2, %s20
          %p151 = scmp.lt.s32.totalorder %s19, 1
          %s152 = scalar_select %p151, %s19, 1
          %p153 = scmp.lt.s32.totalorder %s150, 1
          %s154 = scalar_select %p153, %s150, 1
          %s155 = smul.addr %s152, 2
          %s156 = sadd.s32 %s154, %s155
          %s157 = smul.addr %s156, 4
          %s158 = scalar_lea.vmem %s1, %s157
          %s159 = smul.u32 2, %s20
        $region28: #{tpu_custom_call.1} parent=23 // pred_fallthru
          _
      $region24: #{tpu_custom_call.1} parent=5 // pred_fallthru
        _
      %p160 = scmp.le.s32.totalorder 1, %s12
      %p161 = scmp.lt.s32.totalorder %s12, 3
      %p162 = pnand %p160, %p161
      %p163 = pneg %p162
      // Predicated region
      $region29: #{tpu_custom_call.1} parent=5 // pred_check
        _
      $region30: #{tpu_custom_call.1} parent=5 // pred_check_branch
        %165 = sbr.rel (%p162) target = $region32
      $region31: #{tpu_custom_call.1} parent=5 // pred_region
        %s166 = ssub.s32 %s12, 1
        %p167 = pneg %p45
        %p168 = pneg %p42
        %s169 = smul.u32 2, %s22
        %p170 = scmp.lt.s32.totalorder %s21, 1
        %s171 = scalar_select %p170, %s21, 1
        %p172 = scmp.lt.s32.totalorder %s169, 1
        %s173 = scalar_select %p172, %s169, 1
        %s174 = smul.addr %s171, 2
        %s175 = sadd.s32 %s173, %s174
        %s176 = smul.addr %s175, 4
        %s177 = scalar_lea.vmem %s1, %s176
        %p178 = pneg %p73
        %p179 = pneg %p70
        %p180 = pneg %p94
        %p181 = pneg %p91
        %p182 = pneg %p122
        %p183 = pneg %p119
        %s184 = sand.u32 %s109, 1
        %s185 = scalar_lea.sflag [#allocation3], %s184
        %s186 = sand.u32 %s109, 1
        %s187 = smul.addr %s186, 64
        %s188 = scalar_lea.vmem [#allocation2], %s187
        %s189 = smul.u32 2, %s22
        %p190 = scmp.lt.s32.totalorder %s21, 1
        %s191 = scalar_select %p190, %s21, 1
        %p192 = scmp.lt.s32.totalorder %s189, 1
        %s193 = scalar_select %p192, %s189, 1
        %s194 = smul.addr %s191, 2
        %s195 = sadd.s32 %s193, %s194
        %s196 = smul.addr %s195, 4
        %s197 = scalar_lea.vmem %s1, %s196
        %s198 = smul.u32 2, %s22
        %s199 = smul.u32 2, %s22
        %v200 = vld [vmem:[%s0] sm:$0xff]
        %v201 = vld [vmem:[%s0 + $0x8] sm:$0xff]
        %v202 = vld [vmem:[%s0 + $0x10] sm:$0xff]
        %v203 = vld [vmem:[%s0 + $0x18] sm:$0xff]
        %v204 = vld [vmem:[%s197] sm:$0xff]
        %v205 = vld [vmem:[%s2] sm:$0xff]
        %v206 = vld [vmem:[%s2 + $0x8] sm:$0xff]
        %v207 = vld [vmem:[%s2 + $0x10] sm:$0xff]
        %v208 = vld [vmem:[%s2 + $0x18] sm:$0xff]
        %210 = vset.pattern.permute.xlu0 0
        %211 = vperm.xlu0 %210, %v205
        %v212 = vpop.permute.xlu0 %211
        %215 = vset.pattern.permute.xlu0 0
        %216 = vperm.xlu0 %215, %v206
        %v217 = vpop.permute.xlu0 %216
        %220 = vset.pattern.permute.xlu0 0
        %221 = vperm.xlu0 %220, %v207
        %v222 = vpop.permute.xlu0 %221
        %225 = vset.pattern.permute.xlu0 0
        %226 = vperm.xlu0 %225, %v208
        %v227 = vpop.permute.xlu0 %226
        %v230 = vcombine.high %v204, %v204
        %vm231 = vcmask 31744
        %v233 = vsel %vm231, %v200, 0
        %v236 = vsel %vm231, %v201, 0
        %v239 = vsel %vm231, %v202, 0
        %v242 = vsel %vm231, %v203, 0
        %vm244 = vcmask 1043456
        %v245 = vsel %vm244, %v204, 0
        %v247 = vsel %vm244, %v230, 0
        %249 = vmatprep.subr.mxu0 0.0
        %250 = vmatpush1.msra.mxu0 0.0
        %251 = vmatprep.subr.mxu0 0.0
        %252 = vmatpush1.msra.mxu0 0.0
        %253 = vmatprep.subr.mxu0 0.0
        %254 = vmatpush1.msra.mxu0 0.0
        %255 = vmatprep.subr.mxu0 0.0
        %256 = vmatpush1.msra.mxu0 0.0
        %257 = vmatprep.subr.mxu0 0.0
        %258 = vmatpush1.msra.mxu0 0.0
        %259 = vmatprep.subr.mxu0 0.0
        %260 = vmatpush1.msra.mxu0 0.0
        %261 = vmatprep.subr.mxu0 0.0
        %262 = vmatpush1.msra.mxu0 0.0
        %263 = vmatprep.subr.mxu0 0.0
        %264 = vmatpush1.msra.mxu0 0.0
        %265 = vmatprep.subr.mxu0 0.0
        %266 = vmatpush1.msra.mxu0 0.0
        %267 = vmatprep.subr.mxu0 0.0
        %268 = vmatpush1.msra.mxu0 0.0
        %269 = vmatprep.subr.mxu0 0.0
        %270 = vmatpush1.msra.mxu0 0.0
        %271 = vmatprep.subr.mxu0 0.0
        %272 = vmatpush1.msra.mxu0 0.0
        %273 = vmatprep.subr.mxu0 0.0
        %274 = vmatpush1.msra.mxu0 0.0
        %275 = vmatprep.subr.mxu0 0.0
        %276 = vmatpush1.msra.mxu0 0.0
        %277 = vmatprep.subr.mxu0 0.0
        %278 = vmatpush1.msra.mxu0 0.0
        %279 = vmatprep.subr.mxu0 %v247
        %280 = vmatpush1.msra.mxu0 %v245
        %281 = vmatprep.subr.mxu0 0.0
        %282 = vmatpush2.msra.mxu0 0.0
        %283 = vmatprep.subr.mxu0 0.0
        %284 = vmatpush2.msra.mxu0 0.0
        %285 = vmatprep.subr.mxu0 0.0
        %286 = vmatpush2.msra.mxu0 0.0
        %287 = vmatprep.subr.mxu0 0.0
        %288 = vmatpush2.msra.mxu0 0.0
        %289 = vmatprep.subr.mxu0 0.0
        %290 = vmatpush2.msra.mxu0 0.0
        %291 = vmatprep.subr.mxu0 0.0
        %292 = vmatpush2.msra.mxu0 0.0
        %293 = vmatprep.subr.mxu0 0.0
        %294 = vmatpush2.msra.mxu0 0.0
        %295 = vmatprep.subr.mxu0 0.0
        %296 = vmatpush2.msra.mxu0 0.0
        %297 = vmatprep.subr.mxu0 0.0
        %298 = vmatpush2.msra.mxu0 0.0
        %299 = vmatprep.subr.mxu0 0.0
        %300 = vmatpush2.msra.mxu0 0.0
        %301 = vmatprep.subr.mxu0 0.0
        %302 = vmatpush2.msra.mxu0 0.0
        %303 = vmatprep.subr.mxu0 0.0
        %304 = vmatpush2.msra.mxu0 0.0
        %305 = vmatprep.subr.mxu0 0.0
        %306 = vmatpush2.msra.mxu0 0.0
        %307 = vmatprep.subr.mxu0 0.0
        %308 = vmatpush2.msra.mxu0 0.0
        %309 = vmatprep.subr.mxu0 0.0
        %310 = vmatpush2.msra.mxu0 0.0
        %311 = vmatprep.subr.mxu0 0.0
        %312 = vmatpush2.msra.mxu0 0.0
        %313 = vmatprep.mubr.f32.mxu0 0.0
        %314 = vmatmul.mubr.f32.gmra.mxu0 %v233
        %v315 = vpop.f32.mrf.mxu0
        %v316 = vadd.f32 %v212, %v315
        %v317 = vpop.f32.mrf.mxu0
        %v318 = vadd.f32 %v212, %v317
        %319 = vmatprep.mubr.f32.mxu0 0.0
        %320 = vmatmul.mubr.f32.gmra.mxu0 %v236
        %v321 = vpop.f32.mrf.mxu0
        %v322 = vadd.f32 %v217, %v321
        %v323 = vpop.f32.mrf.mxu0
        %v324 = vadd.f32 %v217, %v323
        %325 = vmatprep.mubr.f32.mxu0 0.0
        %326 = vmatmul.mubr.f32.gmra.mxu0 %v239
        %v327 = vpop.f32.mrf.mxu0
        %v328 = vadd.f32 %v222, %v327
        %v329 = vpop.f32.mrf.mxu0
        %v330 = vadd.f32 %v222, %v329
        %331 = vmatprep.mubr.f32.mxu0 0.0
        %332 = vmatmul.mubr.f32.gmra.mxu0 %v242
        %v333 = vpop.f32.mrf.mxu0
        %v334 = vadd.f32 %v227, %v333
        %v335 = vpop.f32.mrf.mxu0
        %v336 = vadd.f32 %v227, %v335
        %337 = vdwg.mxu0
        %v338 = vmax.f32 %v316, 0.0
        %v339 = vmax.f32 %v318, 0.0
        %v340 = vmax.f32 %v322, 0.0
        %v341 = vmax.f32 %v324, 0.0
        %v342 = vmax.f32 %v328, 0.0
        %v343 = vmax.f32 %v330, 0.0
        %v344 = vmax.f32 %v334, 0.0
        %v345 = vmax.f32 %v336, 0.0
        %346 = vst [vmem:[%s188] sm:$0xff] %v338
        %347 = vst [vmem:[%s188 + $0x8] sm:$0xff] %v339
        %348 = vst [vmem:[%s188 + $0x10] sm:$0xff] %v340
        %349 = vst [vmem:[%s188 + $0x18] sm:$0xff] %v341
        %350 = vst [vmem:[%s188 + $0x20] sm:$0xff] %v342
        %351 = vst [vmem:[%s188 + $0x28] sm:$0xff] %v343
        %352 = vst [vmem:[%s188 + $0x30] sm:$0xff] %v344
        %353 = vst [vmem:[%s188 + $0x38] sm:$0xff] %v345
        %s354 = sand.u32 %s109, 1
        %s355 = scalar_lea.sflag [#allocation3], %s354
        %s356 = sand.u32 %s109, 1
        %s357 = smul.addr %s356, 64
        %s358 = scalar_lea.vmem [#allocation2], %s357
        // Predicated region
        $region33: #{tpu_custom_call.1} parent=31 // pred_check
          %p359 = pneg %p119
        $region34: #{tpu_custom_call.1} parent=31 // pred_check_branch
          %361 = sbr.rel (%p359) target = $region36
        $region35: #{tpu_custom_call.1} parent=31 // pred_region
          %s362 = smul.u32 2, %s22
          %s364 = ssub.s32 1024, 1024
          %365 = vsyncadd %s355, %s364
          %s366 = smul.addr %s21, 8
          %s367 = sadd.s32 %s362, %s366
          %s368 = smul.addr %s367, 128
          %s369 = scalar_lea.hbm %s3, %s368
          %s370 = sshll.u32 %s358, 4
          %s371 = int_to_ptr.vmem [resolvable:$true] %s370
          %376 = dma.vmem_to_hbm [thread:$0]  %s371, 1024, %s369, %s355, 256, 256, 16
        $region36: #{tpu_custom_call.1} parent=31 // pred_fallthru
          _
      $region32: #{tpu_custom_call.1} parent=5 // pred_fallthru
        _
      %p377 = scmp.le.s32.totalorder 2, %s12
      // Predicated region
      $region37: #{tpu_custom_call.1} parent=5 // pred_check
        %p378 = pneg %p377
      $region38: #{tpu_custom_call.1} parent=5 // pred_check_branch
        %380 = sbr.rel (%p378) target = $region40
      $region39: #{tpu_custom_call.1} parent=5 // pred_region
        %s381 = ssub.s32 %s12, 2
        // Predicated region
        $region41: #{tpu_custom_call.1} parent=39 // pred_check
          %p382 = pneg %p125
        $region42: #{tpu_custom_call.1} parent=39 // pred_check_branch
          %384 = sbr.rel (%p382) target = $region44
        $region43: #{tpu_custom_call.1} parent=39 // pred_region
          %s385 = sand.u32 %s110, 1
          %s386 = scalar_lea.sflag [#allocation3], %s385
          %s387 = sand.u32 %s110, 1
          %s388 = smul.addr %s387, 64
          %s389 = scalar_lea.vmem [#allocation2], %s388
          %390 = dma.done %s386, 1024
        $region44: #{tpu_custom_call.1} parent=39 // pred_fallthru
          _
      $region40: #{tpu_custom_call.1} parent=5 // pred_fallthru
        _
    $region6: #{tpu_custom_call.1} parent=1 // loop_footer
      %s16 = sadd.s32 1, %s12
    $region7: #{tpu_custom_call.1} parent=1 // loop_footer_branch
      %11 = sbr.rel target = $region3
    $region8: #{tpu_custom_call.1} parent=1 // loop_exit
      _
    %391 = vsyncpa [#allocation3], 1
    %s392 = scalar_lea.sflag [#allocation3], 1
    %393 = vsyncpa %s392, 1

</llo_original>
